<compile_context>
chip_gen: v6e
topology: v6e:2x2x1
jax: 0.10.0
libtpu: 0.0.40
codegen_flags: <defaults>
</compile_context>

<pallas_src>
import functools

import numpy as np
import jax
import jax.numpy as jnp
from jax.experimental import pallas as pl
from jax.experimental.pallas import tpu as pltpu

DTYPE = jnp.float32           # parameter / recorded-output dtype
ACT_DTYPE = jnp.bfloat16      # on-device activation / matmul operand dtype
BN_EPS = 1e-5
VMEM_LIMIT = 32 * 1024 * 1024

# ResNet-152 architecture constants (torchvision Bottleneck, expansion 4).
EXPANSION = 4
BLOCKS = (3, 8, 36, 3)
PLANES = (64, 128, 256, 512)


def _round_up(x, m):
    return (x + m - 1) // m * m


# --------------------------------------------------------------------------
# Tile-size pickers.  M tiles are multiples of 16 (bf16 sublane tiling);
# K is a single full block whenever the working set fits; N tiles divide N.
# --------------------------------------------------------------------------
def _pick_m_tile(M):
    Mp = _round_up(M, 16)
    for c in (256, 224, 192, 160, 128):
        if Mp % c == 0:
            return c, Mp
    if Mp <= 512:
        return Mp, Mp                  # single full-M block (deep layers)
    Mp = _round_up(M, 128)
    return 128, Mp


def _pick_n_tile(N):
    for c in (256, 128):
        if N % c == 0:
            return c, N
    if N <= 256:
        return N, N                    # full-N block (stem / layer1: N=64)
    Np = _round_up(N, 128)
    return 128, Np


def _pick_k_tile(K, tm, tn):
    """Full-K single step when the double-buffered block working set fits."""
    budget = 14 * 1024 * 1024

    def footprint(tk):
        # 2 bytes (bf16) * double-buffered lhs/w blocks + fp32 acc/out margin.
        return 2 * 2 * (tm * tk + tk * tn) + 4 * 3 * tm * tn

    tk = K
    if K % 128 == 0:
        while footprint(tk) > budget and tk % 256 == 0:
            tk //= 2
    return tk, K


# --------------------------------------------------------------------------
# Pallas kernels
# --------------------------------------------------------------------------
def _mm_affine_kernel(*refs, relu, add_residual):
    """out = maybe_relu((x @ w) * scale + bias [+ residual]); fp32 acc/epilogue."""
    if add_residual:
        x_ref, w_ref, s_ref, b_ref, r_ref, o_ref, acc_ref = refs
    else:
        x_ref, w_ref, s_ref, b_ref, o_ref, acc_ref = refs
        r_ref = None

    k = pl.program_id(2)

    @pl.when(k == 0)
    def _():
        acc_ref[...] = jnp.zeros_like(acc_ref)

    acc_ref[...] += jnp.dot(x_ref[...], w_ref[...],
                            preferred_element_type=jnp.float32)

    @pl.when(k == pl.num_programs(2) - 1)
    def _():
        y = acc_ref[...] * s_ref[...] + b_ref[...]
        if add_residual:
            y = y + r_ref[...].astype(jnp.float32)
        if relu:
            y = jnp.maximum(y, 0.0)
        o_ref[...] = y.astype(o_ref.dtype)


def matmul_affine(lhs, w, scale, bias, *, relu, residual=None):
    """(M,K)@(K,N) in bf16 with fp32 acc, per-column affine, +residual, ReLU."""
    M, K = lhs.shape
    K2, N = w.shape
    assert K == K2
    tm, Mp = _pick_m_tile(M)
    tn, Np = _pick_n_tile(N)
    tk, Kp = _pick_k_tile(K, tm, tn)

    # v7x megacore: keep >=2 blocks along a parallel axis whenever possible.
    if (Mp // tm) * (Np // tn) == 1 and tm >= 32 and tm % 32 == 0:
        tm //= 2

    lhs = lhs.astype(ACT_DTYPE)
    w = w.astype(ACT_DTYPE)
    if Mp != M:
        lhs = jnp.pad(lhs, ((0, Mp - M), (0, 0)))
    if Np != N:
        w = jnp.pad(w, ((0, 0), (0, Np - N)))
    s2 = scale.reshape(1, N).astype(jnp.float32)
    b2 = bias.reshape(1, N).astype(jnp.float32)
    if Np != N:
        s2 = jnp.pad(s2, ((0, 0), (0, Np - N)))
        b2 = jnp.pad(b2, ((0, 0), (0, Np - N)))

    ins = [lhs, w, s2, b2]
    in_specs = [
        pl.BlockSpec((tm, tk), lambda i, j, k: (i, k)),
        pl.BlockSpec((tk, tn), lambda i, j, k: (k, j)),
        pl.BlockSpec((1, tn), lambda i, j, k: (0, j)),
        pl.BlockSpec((1, tn), lambda i, j, k: (0, j)),
    ]
    if residual is not None:
        r = residual.astype(ACT_DTYPE)
        if Mp != M or Np != N:
            r = jnp.pad(r, ((0, Mp - M), (0, Np - N)))
        ins.append(r)
        in_specs.append(pl.BlockSpec((tm, tn), lambda i, j, k: (i, j)))

    out = pl.pallas_call(
        functools.partial(_mm_affine_kernel, relu=relu,
                          add_residual=residual is not None),
        out_shape=jax.ShapeDtypeStruct((Mp, Np), ACT_DTYPE),
        grid=(Mp // tm, Np // tn, Kp // tk),
        in_specs=in_specs,
        out_specs=pl.BlockSpec((tm, tn), lambda i, j, k: (i, j)),
        scratch_shapes=[pltpu.VMEM((tm, tn), jnp.float32)],
        compiler_params=pltpu.CompilerParams(
            dimension_semantics=("parallel", "parallel", "arbitrary"),
            vmem_limit_bytes=VMEM_LIMIT),
    )(*ins)
    if Mp != M or Np != N:
        out = out[:M, :N]
    return out


def _stem_kernel(x_ref, w_ref, s_ref, b_ref, conv_ref, bn_ref, relu_ref):
    """Stem 7x7 conv + bn1 + relu fused; all three outputs are recorded."""
    conv = jnp.dot(x_ref[...], w_ref[...], preferred_element_type=jnp.float32)
    bn = conv * s_ref[...] + b_ref[...]
    conv_ref[...] = conv.astype(conv_ref.dtype)
    bn_ref[...] = bn.astype(bn_ref.dtype)
    relu_ref[...] = jnp.maximum(bn, 0.0).astype(relu_ref.dtype)


def _max_reduce_kernel(x_ref, o_ref):
    # x: (9, tm, C) stacked pooling windows -> max over window axis.
    o_ref[...] = jnp.max(x_ref[...], axis=0)


def _mean_reduce_kernel(x_ref, o_ref):
    # x: (B, H*W, tc) -> mean over spatial axis (adaptive avg pool to 1x1).
    o_ref[...] = jnp.mean(x_ref[...].astype(jnp.float32), axis=1, keepdims=True)


# --------------------------------------------------------------------------
# Conv / pool wrappers (data-movement glue in plain JAX, hot path in Pallas)
# --------------------------------------------------------------------------
def _im2col(x_nhwc, k, stride, padding, Ho, Wo):
    # TODO(synk): materializes k*k shifted windows in HBM (bf16); a direct
    # Pallas conv would need halo blocks / in-kernel relayouts.
    B, H, W, C = x_nhwc.shape
    xp = x_nhwc
    if padding > 0:
        xp = jnp.pad(x_nhwc,
                     ((0, 0), (padding, padding), (padding, padding), (0, 0)))
    cols = []
    for dy in range(k):
        for dx in range(k):
            cols.append(xp[:, dy:dy + stride * (Ho - 1) + 1:stride,
                            dx:dx + stride * (Wo - 1) + 1:stride, :])
    patches = cols[0] if len(cols) == 1 else jnp.concatenate(cols, axis=-1)
    return patches.reshape(B * Ho * Wo, k * k * C)


@functools.partial(jax.jit, static_argnames=("k", "stride", "padding", "relu"))
def conv_bn(x_nhwc, w_mat, scale, bias, residual=None, *,
            k, stride, padding, relu):
    """k x k conv (NHWC) with folded-BN affine, optional residual add + ReLU."""
    B, H, W, C = x_nhwc.shape
    Ho = (H + 2 * padding - k) // stride + 1
    Wo = (W + 2 * padding - k) // stride + 1

    if k == 1 and stride == 1:
        lhs = x_nhwc.reshape(B * H * W, C)              # pure reshape, no copy
    else:
        lhs = _im2col(x_nhwc, k, stride, padding, Ho, Wo)

    res2d = None if residual is None else residual.reshape(B * Ho * Wo, -1)
    out = matmul_affine(lhs, w_mat, scale, bias, relu=relu, residual=res2d)
    return out.reshape(B, Ho, Wo, -1)


@jax.jit
def stem_conv_bn_relu(x_nhwc, w_mat, scale, bias):
    """7x7/2 stem conv; emits raw conv, bn1 and relu outputs from one kernel."""
    B, H, W, C = x_nhwc.shape
    k, stride, padding = 7, 2, 3
    Ho = (H + 2 * padding - k) // stride + 1
    Wo = (W + 2 * padding - k) // stride + 1
    lhs = _im2col(x_nhwc, k, stride, padding, Ho, Wo).astype(ACT_DTYPE)
    M, K = lhs.shape                                   # K = 147, no padding
    N = w_mat.shape[1]
    tm, Mp = _pick_m_tile(M)
    if Mp != M:
        lhs = jnp.pad(lhs, ((0, Mp - M), (0, 0)))

    outs = pl.pallas_call(
        _stem_kernel,
        out_shape=tuple(jax.ShapeDtypeStruct((Mp, N), ACT_DTYPE)
                        for _ in range(3)),
        grid=(Mp // tm,),
        in_specs=[pl.BlockSpec((tm, K), lambda i: (i, 0)),
                  pl.BlockSpec((K, N), lambda i: (0, 0)),
                  pl.BlockSpec((1, N), lambda i: (0, 0)),
                  pl.BlockSpec((1, N), lambda i: (0, 0))],
        out_specs=tuple(pl.BlockSpec((tm, N), lambda i: (i, 0))
                        for _ in range(3)),
        compiler_params=pltpu.CompilerParams(
            dimension_semantics=("parallel",),
            vmem_limit_bytes=VMEM_LIMIT),
    )(lhs, w_mat.astype(ACT_DTYPE),
      scale.reshape(1, N).astype(jnp.float32),
      bias.reshape(1, N).astype(jnp.float32))

    conv, bn, relu = (o[:M].reshape(B, Ho, Wo, N) for o in outs)
    return conv, bn, relu


@jax.jit
def maxpool_3x3_s2(x_nhwc):
    B, H, W, C = x_nhwc.shape
    Ho = (H + 2 - 3) // 2 + 1
    Wo = (W + 2 - 3) // 2 + 1
    xp = jnp.pad(x_nhwc, ((0, 0), (1, 1), (1, 1), (0, 0)),
                 constant_values=-jnp.inf)
    wins = []
    for dy in range(3):
        for dx in range(3):
            wins.append(xp[:, dy:dy + 2 * (Ho - 1) + 1:2,
                            dx:dx + 2 * (Wo - 1) + 1:2, :])
    M = B * Ho * Wo
    stacked = jnp.stack(wins, axis=0).reshape(9, M, C)

    # Lane-dense fold: (9, M, 64) -> (9, M/2, 128) so stores are full-width.
    fold = 1
    if C < 128 and 128 % C == 0 and M % (128 // C) == 0:
        fold = 128 // C
    Mf, Cf = M // fold, C * fold
    stacked = stacked.reshape(9, Mf, Cf)

    tm, Mp = _pick_m_tile(Mf)
    if Mp != Mf:
        stacked = jnp.pad(stacked, ((0, 0), (0, Mp - Mf), (0, 0)))
    out = pl.pallas_call(
        _max_reduce_kernel,
        out_shape=jax.ShapeDtypeStruct((Mp, Cf), ACT_DTYPE),
        grid=(Mp // tm,),
        in_specs=[pl.BlockSpec((9, tm, Cf), lambda i: (0, i, 0))],
        out_specs=pl.BlockSpec((tm, Cf), lambda i: (i, 0)),
        compiler_params=pltpu.CompilerParams(
            dimension_semantics=("parallel",),
            vmem_limit_bytes=VMEM_LIMIT),
    )(stacked)
    if Mp != Mf:
        out = out[:Mf]
    return out.reshape(B, Ho, Wo, C)


@jax.jit
def global_avgpool(x_nhwc):
    B, H, W, C = x_nhwc.shape
    x3 = x_nhwc.reshape(B, H * W, C)
    tc = 256 if C % 256 == 0 else (128 if C % 128 == 0 else C)
    out = pl.pallas_call(
        _mean_reduce_kernel,
        out_shape=jax.ShapeDtypeStruct((B, 1, C), DTYPE),
        grid=(C // tc,),
        in_specs=[pl.BlockSpec((B, H * W, tc), lambda j: (0, 0, j))],
        out_specs=pl.BlockSpec((B, 1, tc), lambda j: (0, 0, j)),
        compiler_params=pltpu.CompilerParams(
            dimension_semantics=("parallel",),
            vmem_limit_bytes=VMEM_LIMIT),
    )(x3)
    return out.reshape(B, 1, 1, C)


# --------------------------------------------------------------------------
# Deterministic synthetic parameters with real ResNet-152 shapes
# --------------------------------------------------------------------------
def _fold_bn(rng, cout):
    gamma = 1.0 + 0.1 * rng.standard_normal(cout)
    beta = 0.1 * rng.standard_normal(cout)
    mean = 0.1 * rng.standard_normal(cout)
    var = 1.0 + 0.1 * np.abs(rng.standard_normal(cout))
    scale = (gamma / np.sqrt(var + BN_EPS)).astype(np.float32)
    bias = (beta - mean * gamma / np.sqrt(var + BN_EPS)).astype(np.float32)
    return jnp.asarray(scale), jnp.asarray(bias)


def _make_conv_bn(rng, cin, cout, k):
    fan_in = cin * k * k
    w = (rng.standard_normal((k * k * cin, cout)) *
         np.sqrt(2.0 / fan_in)).astype(np.float32)
    scale, bias = _fold_bn(rng, cout)
    return {"w": jnp.asarray(w, dtype=ACT_DTYPE), "scale": scale,
            "bias": bias, "k": k}


def _make_bottleneck(rng, inplanes, planes, stride):
    p = {
        "conv1": _make_conv_bn(rng, inplanes, planes, 1),
        "conv2": _make_conv_bn(rng, planes, planes, 3),
        "conv3": _make_conv_bn(rng, planes, planes * EXPANSION, 1),
        "stride": stride,
    }
    if stride != 1 or inplanes != planes * EXPANSION:
        p["downsample"] = _make_conv_bn(rng, inplanes, planes * EXPANSION, 1)
    return p


def make_resnet152_params(seed=0):
    rng = np.random.default_rng(seed)
    params = {}
    # Stem: 7x7/2 conv, 3->64, no bias (conv output recorded raw, pre-BN).
    w = (rng.standard_normal((7 * 7 * 3, 64)) *
         np.sqrt(2.0 / (3 * 49))).astype(np.float32)
    params["conv1"] = {"w": jnp.asarray(w, dtype=ACT_DTYPE)}
    s, b = _fold_bn(rng, 64)
    params["bn1"] = {"scale": s, "bias": b}
    inplanes = 64
    for li, (planes, nblocks, stride) in enumerate(
            zip(PLANES, BLOCKS, (1, 2, 2, 2)), start=1):
        blocks = []
        for bi in range(nblocks):
            blocks.append(_make_bottleneck(rng, inplanes, planes,
                                           stride if bi == 0 else 1))
            inplanes = planes * EXPANSION
        params[f"layer{li}"] = blocks
    return params


# --------------------------------------------------------------------------
# Forward pass: returns the 9 recorded intermediates (NCHW), like the module.
# --------------------------------------------------------------------------
def _apply_conv_bn(x, p, stride, padding, relu, residual=None):
    return conv_bn(x, p["w"], p["scale"], p["bias"], residual,
                   k=p["k"], stride=stride, padding=padding, relu=relu)


def bottleneck_forward(x, p):
    stride = p["stride"]
    if "downsample" in p:
        identity = _apply_conv_bn(x, p["downsample"], stride, 0, False)
    else:
        identity = x
    out = _apply_conv_bn(x, p["conv1"], 1, 0, True)
    out = _apply_conv_bn(out, p["conv2"], stride, 1, True)
    # conv3: BN affine + residual add + ReLU fused into the matmul epilogue.
    out = _apply_conv_bn(out, p["conv3"], 1, 0, True, residual=identity)
    return out


def resnet152_features(params, x_nchw):
    x = jnp.transpose(x_nchw, (0, 2, 3, 1)).astype(ACT_DTYPE)  # NHWC bf16
    layers = []

    def record(t):  # back to NCHW fp32 like PyTorch
        layers.append(jnp.transpose(t, (0, 3, 1, 2)).astype(DTYPE))

    # children 0-2: conv1 (7x7/2) + bn1 + relu fused in one 3-output kernel.
    conv, bn, relu = stem_conv_bn_relu(x, params["conv1"]["w"],
                                       params["bn1"]["scale"],
                                       params["bn1"]["bias"])
    record(conv)
    record(bn)
    record(relu)
    x = relu
    # child 3: maxpool 3x3 / 2
    x = maxpool_3x3_s2(x)
    record(x)
    # children 4-7: layer1..layer4
    for li in range(1, 5):
        for bp in params[f"layer{li}"]:
            x = bottleneck_forward(x, bp)
        record(x)
    # child 8: adaptive avg pool -> (B, C, 1, 1)
    x = global_avgpool(x)
    record(x)
    return layers


if __name__ == "__main__":
    params = make_resnet152_params(seed=0)
    key = jax.random.PRNGKey(0)
    x = jax.random.normal(key, (2, 3, 64, 64), dtype=DTYPE)  # NCHW, like PyTorch

    outs = resnet152_features(params, x)
    outs = jax.block_until_ready(outs)

    expected = [(2, 64, 32, 32), (2, 64, 32, 32), (2, 64, 32, 32),
                (2, 64, 16, 16), (2, 256, 16, 16), (2, 512, 8, 8),
                (2, 1024, 4, 4), (2, 2048, 2, 2), (2, 2048, 1, 1)]
    assert [tuple(o.shape) for o in outs] == expected, \
        [tuple(o.shape) for o in outs]
    assert all(bool(jnp.all(jnp.isfinite(o))) for o in outs)
    print("KERNEL_OK")
</pallas_src>

<mosaic_0001>
module attributes {stable_mosaic.version = 11 : i64} {
  func.func @_stem_kernel(%arg0: i32, %arg1: memref<256x147xbf16, #tpu.memory_space<vmem>>, %arg2: memref<147x64xbf16, #tpu.memory_space<vmem>>, %arg3: memref<1x64xf32, #tpu.memory_space<vmem>>, %arg4: memref<1x64xf32, #tpu.memory_space<vmem>>, %arg5: memref<256x64xbf16, #tpu.memory_space<vmem>>, %arg6: memref<256x64xbf16, #tpu.memory_space<vmem>>, %arg7: memref<256x64xbf16, #tpu.memory_space<vmem>>) attributes {dimension_semantics = [#tpu.dimension_semantics<parallel>], iteration_bounds = array<i64: 8>, scalar_prefetch = 0 : i64, scratch_operands = 0 : i64, tpu.core_type = #tpu.core_type<tc>, window_params = [{transform_indices = @transform_0, window_bounds = array<i64: 256, 147>}, {pipeline_mode = #tpu.pipeline_mode<synchronous>, transform_indices = @transform_1, window_bounds = array<i64: 147, 64>}, {pipeline_mode = #tpu.pipeline_mode<synchronous>, transform_indices = @transform_2, window_bounds = array<i64: 1, 64>}, {pipeline_mode = #tpu.pipeline_mode<synchronous>, transform_indices = @transform_3, window_bounds = array<i64: 1, 64>}, {transform_indices = @transform_4, window_bounds = array<i64: 256, 64>}, {transform_indices = @transform_5, window_bounds = array<i64: 256, 64>}, {transform_indices = @transform_6, window_bounds = array<i64: 256, 64>}]} {
    %c0 = arith.constant 0 : index
    %c0_0 = arith.constant 0 : index
    %0 = vector.load %arg1[%c0, %c0_0] : memref<256x147xbf16, #tpu.memory_space<vmem>>, vector<256x147xbf16>
    %c0_1 = arith.constant 0 : index
    %c0_2 = arith.constant 0 : index
    %1 = vector.load %arg2[%c0_1, %c0_2] : memref<147x64xbf16, #tpu.memory_space<vmem>>, vector<147x64xbf16>
    %cst = arith.constant dense<0.000000e+00> : vector<256x64xf32>
    %2 = tpu.matmul %0, %1, %cst {dimension_numbers = #tpu.dot_dimension_numbers<[1], [0], [0], [1], [0, 0, 1, 1], [], []>} : vector<256x147xbf16>, vector<147x64xbf16>, vector<256x64xf32> -> vector<256x64xf32>
    %c0_3 = arith.constant 0 : index
    %c0_4 = arith.constant 0 : index
    %3 = vector.load %arg3[%c0_3, %c0_4] : memref<1x64xf32, #tpu.memory_space<vmem>>, vector<1x64xf32>
    %4 = vector.broadcast %3 : vector<1x64xf32> to vector<256x64xf32>
    %5 = arith.mulf %2, %4 : vector<256x64xf32>
    %c0_5 = arith.constant 0 : index
    %c0_6 = arith.constant 0 : index
    %6 = vector.load %arg4[%c0_5, %c0_6] : memref<1x64xf32, #tpu.memory_space<vmem>>, vector<1x64xf32>
    %7 = vector.broadcast %6 : vector<1x64xf32> to vector<256x64xf32>
    %8 = arith.addf %5, %7 : vector<256x64xf32>
    %9 = arith.truncf %2 : vector<256x64xf32> to vector<256x64xbf16>
    %c0_7 = arith.constant 0 : index
    %c0_8 = arith.constant 0 : index
    %10 = vector.load %arg5[%c0_7, %c0_8] : memref<256x64xbf16, #tpu.memory_space<vmem>>, vector<256x64xbf16>
    tpu.vector_store %arg5[%c0_7, %c0_8], %9 {strides = array<i32>} : memref<256x64xbf16, #tpu.memory_space<vmem>>, vector<256x64xbf16>,
    %11 = arith.truncf %8 : vector<256x64xf32> to vector<256x64xbf16>
    %c0_9 = arith.constant 0 : index
    %c0_10 = arith.constant 0 : index
    %12 = vector.load %arg6[%c0_9, %c0_10] : memref<256x64xbf16, #tpu.memory_space<vmem>>, vector<256x64xbf16>
    tpu.vector_store %arg6[%c0_9, %c0_10], %11 {strides = array<i32>} : memref<256x64xbf16, #tpu.memory_space<vmem>>, vector<256x64xbf16>,
    %cst_11 = arith.constant 0.000000e+00 : f32
    %13 = vector.broadcast %cst_11 : f32 to vector<256x64xf32>
    %14 = arith.maximumf %8, %13 : vector<256x64xf32>
    %15 = arith.truncf %14 : vector<256x64xf32> to vector<256x64xbf16>
    %c0_12 = arith.constant 0 : index
    %c0_13 = arith.constant 0 : index
    %16 = vector.load %arg7[%c0_12, %c0_13] : memref<256x64xbf16, #tpu.memory_space<vmem>>, vector<256x64xbf16>
    tpu.vector_store %arg7[%c0_12, %c0_13], %15 {strides = array<i32>} : memref<256x64xbf16, #tpu.memory_space<vmem>>, vector<256x64xbf16>,
    return
  }
  func.func @transform_0(%arg0: i32) -> (i32, i32) {
    %c0_i32 = arith.constant 0 : i32
    %c0_i32_0 = arith.constant 0 : i32
    return %arg0, %c0_i32 : i32, i32
  }
  func.func @transform_1(%arg0: i32) -> (i32, i32) {
    %c0_i32 = arith.constant 0 : i32
    %c0_i32_0 = arith.constant 0 : i32
    %c0_i32_1 = arith.constant 0 : i32
    return %c0_i32, %c0_i32_0 : i32, i32
  }
  func.func @transform_2(%arg0: i32) -> (i32, i32) {
    %c0_i32 = arith.constant 0 : i32
    %c0_i32_0 = arith.constant 0 : i32
    %c0_i32_1 = arith.constant 0 : i32
    return %c0_i32, %c0_i32_0 : i32, i32
  }
  func.func @transform_3(%arg0: i32) -> (i32, i32) {
    %c0_i32 = arith.constant 0 : i32
    %c0_i32_0 = arith.constant 0 : i32
    %c0_i32_1 = arith.constant 0 : i32
    return %c0_i32, %c0_i32_0 : i32, i32
  }
  func.func @transform_4(%arg0: i32) -> (i32, i32) {
    %c0_i32 = arith.constant 0 : i32
    %c0_i32_0 = arith.constant 0 : i32
    return %arg0, %c0_i32 : i32, i32
  }
  func.func @transform_5(%arg0: i32) -> (i32, i32) {
    %c0_i32 = arith.constant 0 : i32
    %c0_i32_0 = arith.constant 0 : i32
    return %arg0, %c0_i32 : i32, i32
  }
  func.func @transform_6(%arg0: i32) -> (i32, i32) {
    %c0_i32 = arith.constant 0 : i32
    %c0_i32_0 = arith.constant 0 : i32
    return %arg0, %c0_i32 : i32, i32
  }
}

</mosaic_0001>

<llo_original>
// kernel: stem_conv_bn_relu.1
$region0: #{stem_conv_bn_relu.1}
  #allocation0 [shape = 'u32[]', space=smem, size = 0x4, offset = 0x4, fixed_abs, tag = 'smem constant byte address 0x4 - core index']
  #allocation1 [shape = 'u32[144,128]{1,0:T(1,128)}', space=vmem, size = 0x12000, scoped, tag = 'internal scratch']
  %s0 = inlined_call_operand.vmem [shape: bf16[2048,147], index: 0, kind: input, shape index: {}]
  %s1 = inlined_call_operand.vmem [shape: bf16[147,64], index: 1, kind: input, shape index: {}]
  %s2 = inlined_call_operand.vmem [shape: f32[1,64], index: 2, kind: input, shape index: {}]
  %s3 = inlined_call_operand.vmem [shape: f32[1,64], index: 3, kind: input, shape index: {}]
  %s4 = inlined_call_operand.hbm [shape: bf16[2048,64], index: 4, kind: output, shape index: {0}]
  %s5 = inlined_call_operand.hbm [shape: bf16[2048,64], index: 5, kind: output, shape index: {1}]
  %s6 = inlined_call_operand.hbm [shape: bf16[2048,64], index: 6, kind: output, shape index: {2}]
  %7 = xla_tuple %s4, %s5, %s6
  %s8 = sld [smem:[#allocation0]]
  $region65: #{stem_conv_bn_relu.1} parent=0
    _
  %s10 = ssub.s32 1, %s8
  %s11 = scalar_select 0, %s10, %s8
  $region1: #{stem_conv_bn_relu.1} parent=0
    #allocation2 [shape = 'u8[131072]{0}', space=vmem, size = 0x20000, scoped, tag = 'output window, operand 0']
    #allocation3 [shape = 's32[2]{0}', space=sflag, size = 0x8, scoped, tag = 'scoped memory for stem_conv_bn_relu.1']
    #allocation4 [shape = 'u8[131072]{0}', space=vmem, size = 0x20000, scoped, tag = 'output window, operand 1']
    #allocation5 [shape = 's32[2]{0}', space=sflag, size = 0x8, scoped, tag = 'scoped memory for stem_conv_bn_relu.1']
    #allocation6 [shape = 'u8[131072]{0}', space=vmem, size = 0x20000, scoped, tag = 'output window, operand 2']
    %12 = vsyncpa [#allocation3], 0
    %s13 = scalar_lea.sflag [#allocation3], 1
    %14 = vsyncpa %s13, 0
    %15 = vsyncpa [#allocation5], 0
    %s16 = scalar_lea.sflag [#allocation5], 1
    %17 = vsyncpa %s16, 0
    loop: start=0, step=1, limit=10
    $region2: #{stem_conv_bn_relu.1} parent=1 // loop_pre_header
      _
    $region3: #{stem_conv_bn_relu.1} parent=1 // loop_header
      %s19 = sphi 0, %s23
      %p20 = scmp.ge.s32.totalorder %s19, 10
      %s29 = sphi 0, %s31
      %s32 = sphi 0, %s29
      %s33 = sphi 0, %s32
      %s49 = sphi 0, %s33
      %s53 = sphi 0, %s53
      %s55 = sphi 0, %s53
      %s56 = sphi 0, %s55
      %s70 = sphi 0, %s56
      %s74 = sphi 0, %s74
      %s76 = sphi 0, %s74
      %s77 = sphi 0, %s76
      %s91 = sphi 0, %s77
      %s95 = sphi 0, %s95
      %s97 = sphi 0, %s95
      %s98 = sphi 0, %s97
      %s112 = sphi 0, %s98
      %s118 = sphi 0, %s120
      %s121 = sphi 0, %s118
      %s122 = sphi 0, %s121
      %s138 = sphi 0, %s122
      %s144 = sphi 0, %s146
      %s147 = sphi 0, %s144
      %s148 = sphi 0, %s147
      %s164 = sphi 0, %s148
      %s170 = sphi 0, %s172
      %s173 = sphi 0, %s170
      %s174 = sphi 0, %s173
      %s190 = sphi 0, %s174
    $region4: #{stem_conv_bn_relu.1} parent=1 // loop_header_branch
      %22 = sbr.rel (%p20) target = $region8
    $region5: #{stem_conv_bn_relu.1} parent=1 // loop_body
      %s24 = ssub.s32 %s19, 1
      %s25 = ssub.s32 %s19, 2
      %s26 = sadd.s32 %s19, 1
      %s27 = ssub.s32 %s19, %s26
      %p28 = scmp.eq.s32.totalorder %s27, 0
      %s30 = sadd.s32 %s29, 1
      %s31 = scalar_select %p28, %s29, %s30
      %p34 = pneg %p28
      %p35 = scmp.eq.s32.totalorder %s19, 7
      %p36 = por %p34, %p35
      %p37 = scmp.ne.s32.totalorder %s29, %s32
      %p38 = scmp.eq.s32.totalorder %s19, 0
      %p39 = por %p37, %p38
      %p40 = scmp.ne.s32.totalorder %s29, %s32
      %p41 = scmp.eq.s32.totalorder %s24, 7
      %p42 = por %p40, %p41
      %p43 = scmp.ne.s32.totalorder %s32, %s33
      %p44 = scmp.eq.s32.totalorder %s24, 0
      %p45 = por %p43, %p44
      %p46 = scmp.ne.s32.totalorder %s32, %s33
      %p47 = scmp.eq.s32.totalorder %s25, 7
      %p48 = por %p46, %p47
      %p50 = scmp.ne.s32.totalorder %s33, %s49
      %p51 = scmp.eq.s32.totalorder %s25, 0
      %p52 = por %p50, %p51
      %s54 = sadd.s32 %s53, 1
      %p57 = scmp.eq.s32.totalorder %s19, 7
      %p58 = scmp.ne.s32.totalorder %s53, %s55
      %p59 = scmp.eq.s32.totalorder %s19, 0
      %p60 = por %p58, %p59
      %p61 = scmp.ne.s32.totalorder %s53, %s55
      %p62 = scmp.eq.s32.totalorder %s24, 7
      %p63 = por %p61, %p62
      %p64 = scmp.ne.s32.totalorder %s55, %s56
      %p65 = scmp.eq.s32.totalorder %s24, 0
      %p66 = por %p64, %p65
      %p67 = scmp.ne.s32.totalorder %s55, %s56
      %p68 = scmp.eq.s32.totalorder %s25, 7
      %p69 = por %p67, %p68
      %p71 = scmp.ne.s32.totalorder %s56, %s70
      %p72 = scmp.eq.s32.totalorder %s25, 0
      %p73 = por %p71, %p72
      %s75 = sadd.s32 %s74, 1
      %p78 = scmp.eq.s32.totalorder %s19, 7
      %p79 = scmp.ne.s32.totalorder %s74, %s76
      %p80 = scmp.eq.s32.totalorder %s19, 0
      %p81 = por %p79, %p80
      %p82 = scmp.ne.s32.totalorder %s74, %s76
      %p83 = scmp.eq.s32.totalorder %s24, 7
      %p84 = por %p82, %p83
      %p85 = scmp.ne.s32.totalorder %s76, %s77
      %p86 = scmp.eq.s32.totalorder %s24, 0
      %p87 = por %p85, %p86
      %p88 = scmp.ne.s32.totalorder %s76, %s77
      %p89 = scmp.eq.s32.totalorder %s25, 7
      %p90 = por %p88, %p89
      %p92 = scmp.ne.s32.totalorder %s77, %s91
      %p93 = scmp.eq.s32.totalorder %s25, 0
      %p94 = por %p92, %p93
      %s96 = sadd.s32 %s95, 1
      %p99 = scmp.eq.s32.totalorder %s19, 7
      %p100 = scmp.ne.s32.totalorder %s95, %s97
      %p101 = scmp.eq.s32.totalorder %s19, 0
      %p102 = por %p100, %p101
      %p103 = scmp.ne.s32.totalorder %s95, %s97
      %p104 = scmp.eq.s32.totalorder %s24, 7
      %p105 = por %p103, %p104
      %p106 = scmp.ne.s32.totalorder %s97, %s98
      %p107 = scmp.eq.s32.totalorder %s24, 0
      %p108 = por %p106, %p107
      %p109 = scmp.ne.s32.totalorder %s97, %s98
      %p110 = scmp.eq.s32.totalorder %s25, 7
      %p111 = por %p109, %p110
      %p113 = scmp.ne.s32.totalorder %s98, %s112
      %p114 = scmp.eq.s32.totalorder %s25, 0
      %p115 = por %p113, %p114
      %s116 = ssub.s32 %s19, %s26
      %p117 = scmp.eq.s32.totalorder %s116, 0
      %s119 = sadd.s32 %s118, 1
      %s120 = scalar_select %p117, %s118, %s119
      %p123 = pneg %p117
      %p124 = scmp.eq.s32.totalorder %s19, 7
      %p125 = por %p123, %p124
      %p126 = scmp.ne.s32.totalorder %s118, %s121
      %p127 = scmp.eq.s32.totalorder %s19, 0
      %p128 = por %p126, %p127
      %p129 = scmp.ne.s32.totalorder %s118, %s121
      %p130 = scmp.eq.s32.totalorder %s24, 7
      %p131 = por %p129, %p130
      %p132 = scmp.ne.s32.totalorder %s121, %s122
      %p133 = scmp.eq.s32.totalorder %s24, 0
      %p134 = por %p132, %p133
      %p135 = scmp.ne.s32.totalorder %s121, %s122
      %p136 = scmp.eq.s32.totalorder %s25, 7
      %p137 = por %p135, %p136
      %p139 = scmp.ne.s32.totalorder %s122, %s138
      %p140 = scmp.eq.s32.totalorder %s25, 0
      %p141 = por %p139, %p140
      %s142 = ssub.s32 %s19, %s26
      %p143 = scmp.eq.s32.totalorder %s142, 0
      %s145 = sadd.s32 %s144, 1
      %s146 = scalar_select %p143, %s144, %s145
      %p149 = pneg %p143
      %p150 = scmp.eq.s32.totalorder %s19, 7
      %p151 = por %p149, %p150
      %p152 = scmp.ne.s32.totalorder %s144, %s147
      %p153 = scmp.eq.s32.totalorder %s19, 0
      %p154 = por %p152, %p153
      %p155 = scmp.ne.s32.totalorder %s144, %s147
      %p156 = scmp.eq.s32.totalorder %s24, 7
      %p157 = por %p155, %p156
      %p158 = scmp.ne.s32.totalorder %s147, %s148
      %p159 = scmp.eq.s32.totalorder %s24, 0
      %p160 = por %p158, %p159
      %p161 = scmp.ne.s32.totalorder %s147, %s148
      %p162 = scmp.eq.s32.totalorder %s25, 7
      %p163 = por %p161, %p162
      %p165 = scmp.ne.s32.totalorder %s148, %s164
      %p166 = scmp.eq.s32.totalorder %s25, 0
      %p167 = por %p165, %p166
      %s168 = ssub.s32 %s19, %s26
      %p169 = scmp.eq.s32.totalorder %s168, 0
      %s171 = sadd.s32 %s170, 1
      %s172 = scalar_select %p169, %s170, %s171
      %p175 = pneg %p169
      %p176 = scmp.eq.s32.totalorder %s19, 7
      %p177 = por %p175, %p176
      %p178 = scmp.ne.s32.totalorder %s170, %s173
      %p179 = scmp.eq.s32.totalorder %s19, 0
      %p180 = por %p178, %p179
      %p181 = scmp.ne.s32.totalorder %s170, %s173
      %p182 = scmp.eq.s32.totalorder %s24, 7
      %p183 = por %p181, %p182
      %p184 = scmp.ne.s32.totalorder %s173, %s174
      %p185 = scmp.eq.s32.totalorder %s24, 0
      %p186 = por %p184, %p185
      %p187 = scmp.ne.s32.totalorder %s173, %s174
      %p188 = scmp.eq.s32.totalorder %s25, 7
      %p189 = por %p187, %p188
      %p191 = scmp.ne.s32.totalorder %s174, %s190
      %p192 = scmp.eq.s32.totalorder %s25, 0
      %p193 = por %p191, %p192
      %p194 = scmp.le.s32.totalorder 1, %s19
      %p195 = scmp.lt.s32.totalorder %s19, 9
      %p196 = pnand %p194, %p195
      %p197 = pneg %p196
      // Predicated region
      $region9: #{stem_conv_bn_relu.1} parent=5 // pred_check
        _
      $region10: #{stem_conv_bn_relu.1} parent=5 // pred_check_branch
        %199 = sbr.rel (%p196) target = $region12
      $region11: #{stem_conv_bn_relu.1} parent=5 // pred_region
        %s200 = ssub.s32 %s19, 1
        // Predicated region
        $region13: #{stem_conv_bn_relu.1} parent=11 // pred_check
          %p201 = pneg %p66
        $region14: #{stem_conv_bn_relu.1} parent=11 // pred_check_branch
          %203 = sbr.rel (%p201) target = $region16
        $region15: #{stem_conv_bn_relu.1} parent=11 // pred_region
          _
        $region16: #{stem_conv_bn_relu.1} parent=11 // pred_fallthru
          _
        // Predicated region
        $region17: #{stem_conv_bn_relu.1} parent=11 // pred_check
          %p204 = pneg %p87
        $region18: #{stem_conv_bn_relu.1} parent=11 // pred_check_branch
          %206 = sbr.rel (%p204) target = $region20
        $region19: #{stem_conv_bn_relu.1} parent=11 // pred_region
          _
        $region20: #{stem_conv_bn_relu.1} parent=11 // pred_fallthru
          _
        // Predicated region
        $region21: #{stem_conv_bn_relu.1} parent=11 // pred_check
          %p207 = pneg %p108
        $region22: #{stem_conv_bn_relu.1} parent=11 // pred_check_branch
          %209 = sbr.rel (%p207) target = $region24
        $region23: #{stem_conv_bn_relu.1} parent=11 // pred_region
          _
        $region24: #{stem_conv_bn_relu.1} parent=11 // pred_fallthru
          _
      $region12: #{stem_conv_bn_relu.1} parent=5 // pred_fallthru
        _
      %p210 = scmp.lt.s32.totalorder %s19, 8
      // Predicated region
      $region25: #{stem_conv_bn_relu.1} parent=5 // pred_check
        %p211 = pneg %p210
      $region26: #{stem_conv_bn_relu.1} parent=5 // pred_check_branch
        %213 = sbr.rel (%p211) target = $region28
      $region27: #{stem_conv_bn_relu.1} parent=5 // pred_region
        // Predicated region
        $region29: #{stem_conv_bn_relu.1} parent=27 // pred_check
          %p214 = pneg %p39
        $region30: #{stem_conv_bn_relu.1} parent=27 // pred_check_branch
          %216 = sbr.rel (%p214) target = $region32
        $region31: #{stem_conv_bn_relu.1} parent=27 // pred_region
          %s217 = smul.u32 32, %s19
          %p218 = scmp.lt.s32.totalorder %s217, 255
          %s219 = scalar_select %p218, %s217, 255
          %s220 = smul.addr %s219, 2
          %s221 = smul.addr %s220, 4
          %s222 = scalar_lea.vmem %s0, %s221
          %s223 = smul.u32 32, %s19
        $region32: #{stem_conv_bn_relu.1} parent=27 // pred_fallthru
          _
      $region28: #{stem_conv_bn_relu.1} parent=5 // pred_fallthru
        _
      %p224 = scmp.le.s32.totalorder 1, %s19
      %p225 = scmp.lt.s32.totalorder %s19, 9
      %p226 = pnand %p224, %p225
      %p227 = pneg %p226
      // Predicated region
      $region33: #{stem_conv_bn_relu.1} parent=5 // pred_check
        _
      $region34: #{stem_conv_bn_relu.1} parent=5 // pred_check_branch
        %229 = sbr.rel (%p226) target = $region36
      $region35: #{stem_conv_bn_relu.1} parent=5 // pred_region
        %s230 = ssub.s32 %s19, 1
        %s231 = smul.u32 32, %s24
        %p232 = scmp.lt.s32.totalorder %s231, 255
        %s233 = scalar_select %p232, %s231, 255
        %s234 = smul.addr %s233, 2
        %s235 = smul.addr %s234, 4
        %s236 = scalar_lea.vmem %s0, %s235
        %p237 = pneg %p45
        %p238 = pneg %p42
        %p239 = pneg %p66
        %p240 = pneg %p63
        %p241 = pneg %p87
        %p242 = pneg %p84
        %p243 = pneg %p108
        %p244 = pneg %p105
        %p245 = pneg %p134
        %p246 = pneg %p131
        %s247 = sand.u32 %s121, 1
        %s248 = scalar_lea.sflag [#allocation3], %s247
        %s249 = sand.u32 %s121, 1
        %s250 = smul.addr %s249, 128
        %s251 = scalar_lea.vmem [#allocation2], %s250
        %p252 = pneg %p160
        %p253 = pneg %p157
        %s254 = sand.u32 %s24, 1
        %s255 = scalar_lea.sflag [#allocation5], %s254
        %s256 = sand.u32 %s147, 1
        %s257 = smul.addr %s256, 128
        %s258 = scalar_lea.vmem [#allocation4], %s257
        %p259 = pneg %p186
        %p260 = pneg %p183
        %s261 = sand.u32 %s24, 1
        %s262 = scalar_lea.sflag [#allocation5], %s261
        %s263 = sand.u32 %s173, 1
        %s264 = smul.addr %s263, 128
        %s265 = scalar_lea.vmem [#allocation6], %s264
        %s266 = smul.u32 32, %s24
        %p267 = scmp.lt.s32.totalorder %s266, 255
        %s268 = scalar_select %p267, %s266, 255
        %s269 = smul.addr %s268, 2
        %s270 = smul.addr %s269, 4
        %s271 = scalar_lea.vmem %s0, %s270
        %s272 = smul.u32 32, %s24
        %s273 = smul.u32 32, %s24
        %s274 = smul.u32 32, %s24
        %s275 = smul.u32 32, %s24
        %v277 = vld [vmem:[%s271] sm:$0xff]
        %v278 = vld [vmem:[%s271 + $0x8] sm:$0xff]
        %v279 = vld [vmem:[%s271 + $0x10] sm:$0xff]
        %v280 = vld [vmem:[%s271 + $0x18] sm:$0xff]
        %v281 = vld [vmem:[%s271 + $0x20] sm:$0xff]
        %v282 = vld [vmem:[%s271 + $0x28] sm:$0xff]
        %v283 = vld [vmem:[%s271 + $0x30] sm:$0xff]
        %v284 = vld [vmem:[%s271 + $0x38] sm:$0xff]
        %v285 = vld [vmem:[%s271 + $0x40] sm:$0xff]
        %v286 = vld [vmem:[%s271 + $0x48] sm:$0xff]
        %v287 = vld [vmem:[%s271 + $0x50] sm:$0xff]
        %v288 = vld [vmem:[%s271 + $0x58] sm:$0xff]
        %v289 = vld [vmem:[%s271 + $0x60] sm:$0xff]
        %v290 = vld [vmem:[%s271 + $0x68] sm:$0xff]
        %v291 = vld [vmem:[%s271 + $0x70] sm:$0xff]
        %v292 = vld [vmem:[%s271 + $0x78] sm:$0xff]
        %v293 = vld [vmem:[%s271 + $0x80] sm:$0xff]
        %v294 = vld [vmem:[%s271 + $0x88] sm:$0xff]
        %v295 = vld [vmem:[%s271 + $0x90] sm:$0xff]
        %v296 = vld [vmem:[%s271 + $0x98] sm:$0xff]
        %v297 = vld [vmem:[%s271 + $0xa0] sm:$0xff]
        %v298 = vld [vmem:[%s271 + $0xa8] sm:$0xff]
        %v299 = vld [vmem:[%s271 + $0xb0] sm:$0xff]
        %v300 = vld [vmem:[%s271 + $0xb8] sm:$0xff]
        %v301 = vld [vmem:[%s271 + $0xc0] sm:$0xff]
        %v302 = vld [vmem:[%s271 + $0xc8] sm:$0xff]
        %v303 = vld [vmem:[%s271 + $0xd0] sm:$0xff]
        %v304 = vld [vmem:[%s271 + $0xd8] sm:$0xff]
        %v305 = vld [vmem:[%s271 + $0xe0] sm:$0xff]
        %v306 = vld [vmem:[%s271 + $0xe8] sm:$0xff]
        %v307 = vld [vmem:[%s271 + $0xf0] sm:$0xff]
        %v308 = vld [vmem:[%s271 + $0xf8] sm:$0xff]
        %v309 = vld [vmem:[%s1] sm:$0xf]
        %v310 = vld [vmem:[%s1 + $0x4] sm:$0xf]
        %v311 = vld [vmem:[%s1 + $0x8] sm:$0xf]
        %v312 = vld [vmem:[%s1 + $0xc] sm:$0xf]
        %v313 = vld [vmem:[%s1 + $0x10] sm:$0xf]
        %v314 = vld [vmem:[%s1 + $0x14] sm:$0xf]
        %v315 = vld [vmem:[%s1 + $0x18] sm:$0xf]
        %v316 = vld [vmem:[%s1 + $0x1c] sm:$0xf]
        %v317 = vld [vmem:[%s1 + $0x20] sm:$0xf]
        %v318 = vld [vmem:[%s1 + $0x24] sm:$0xf]
        %v319 = vld [vmem:[%s1 + $0x28] sm:$0xf]
        %v320 = vld [vmem:[%s1 + $0x2c] sm:$0xf]
        %v321 = vld [vmem:[%s1 + $0x30] sm:$0xf]
        %v322 = vld [vmem:[%s1 + $0x34] sm:$0xf]
        %v323 = vld [vmem:[%s1 + $0x38] sm:$0xf]
        %v324 = vld [vmem:[%s1 + $0x3c] sm:$0xf]
        %v325 = vld [vmem:[%s1 + $0x40] sm:$0xf]
        %v326 = vld [vmem:[%s1 + $0x44] sm:$0xf]
        %v327 = vld [vmem:[%s1 + $0x48] sm:$0x3]
        %v360 = vunpack.c.l.b16 %v277
        %v361 = vunpack.c.h.b16 %v277
        %v362 = vunpack.c.l.b16 %v278
        %v363 = vunpack.c.h.b16 %v278
        %v364 = vunpack.c.l.b16 %v279
        %v365 = vunpack.c.h.b16 %v279
        %v366 = vunpack.c.l.b16 %v280
        %v367 = vunpack.c.h.b16 %v280
        %v368 = vunpack.c.l.b16 %v281
        %v369 = vunpack.c.h.b16 %v281
        %v370 = vunpack.c.l.b16 %v282
        %v371 = vunpack.c.h.b16 %v282
        %v372 = vunpack.c.l.b16 %v283
        %v373 = vunpack.c.h.b16 %v283
        %v374 = vunpack.c.l.b16 %v284
        %v375 = vunpack.c.h.b16 %v284
        %v376 = vunpack.c.l.b16 %v285
        %v377 = vunpack.c.h.b16 %v285
        %v378 = vunpack.c.l.b16 %v286
        %v379 = vunpack.c.h.b16 %v286
        %v380 = vunpack.c.l.b16 %v287
        %v381 = vunpack.c.h.b16 %v287
        %v382 = vunpack.c.l.b16 %v288
        %v383 = vunpack.c.h.b16 %v288
        %v384 = vunpack.c.l.b16 %v289
        %v385 = vunpack.c.h.b16 %v289
        %v386 = vunpack.c.l.b16 %v290
        %v387 = vunpack.c.h.b16 %v290
        %v388 = vunpack.c.l.b16 %v291
        %v389 = vunpack.c.h.b16 %v291
        %v390 = vunpack.c.l.b16 %v292
        %v391 = vunpack.c.h.b16 %v292
        %v392 = vunpack.c.l.b16 %v293
        %v393 = vunpack.c.h.b16 %v293
        %v394 = vunpack.c.l.b16 %v294
        %v395 = vunpack.c.h.b16 %v294
        %v396 = vunpack.c.l.b16 %v295
        %v397 = vunpack.c.h.b16 %v295
        %v398 = vunpack.c.l.b16 %v296
        %v399 = vunpack.c.h.b16 %v296
        %v400 = vunpack.c.l.b16 %v297
        %v401 = vunpack.c.h.b16 %v297
        %v402 = vunpack.c.l.b16 %v298
        %v403 = vunpack.c.h.b16 %v298
        %v404 = vunpack.c.l.b16 %v299
        %v405 = vunpack.c.h.b16 %v299
        %v406 = vunpack.c.l.b16 %v300
        %v407 = vunpack.c.h.b16 %v300
        %v408 = vunpack.c.l.b16 %v301
        %v409 = vunpack.c.h.b16 %v301
        %v410 = vunpack.c.l.b16 %v302
        %v411 = vunpack.c.h.b16 %v302
        %v412 = vunpack.c.l.b16 %v303
        %v413 = vunpack.c.h.b16 %v303
        %v414 = vunpack.c.l.b16 %v304
        %v415 = vunpack.c.h.b16 %v304
        %v416 = vunpack.c.l.b16 %v305
        %v417 = vunpack.c.h.b16 %v305
        %v418 = vunpack.c.l.b16 %v306
        %v419 = vunpack.c.h.b16 %v306
        %v420 = vunpack.c.l.b16 %v307
        %v421 = vunpack.c.h.b16 %v307
        %v422 = vunpack.c.l.b16 %v308
        %v423 = vunpack.c.h.b16 %v308
        %v424 = vpack.c.b16 %v362, %v360
        %v425 = vpack.c.b16 %v363, %v361
        %v426 = vpack.c.b16 %v366, %v364
        %v427 = vpack.c.b16 %v367, %v365
        %v428 = vpack.c.b16 %v370, %v368
        %v429 = vpack.c.b16 %v371, %v369
        %v430 = vpack.c.b16 %v374, %v372
        %v431 = vpack.c.b16 %v375, %v373
        %v432 = vpack.c.b16 %v378, %v376
        %v433 = vpack.c.b16 %v379, %v377
        %v434 = vpack.c.b16 %v382, %v380
        %v435 = vpack.c.b16 %v383, %v381
        %v436 = vpack.c.b16 %v386, %v384
        %v437 = vpack.c.b16 %v387, %v385
        %v438 = vpack.c.b16 %v390, %v388
        %v439 = vpack.c.b16 %v391, %v389
        %v440 = vpack.c.b16 %v394, %v392
        %v441 = vpack.c.b16 %v395, %v393
        %v442 = vpack.c.b16 %v398, %v396
        %v443 = vpack.c.b16 %v399, %v397
        %v444 = vpack.c.b16 %v402, %v400
        %v445 = vpack.c.b16 %v403, %v401
        %v446 = vpack.c.b16 %v406, %v404
        %v447 = vpack.c.b16 %v407, %v405
        %v448 = vpack.c.b16 %v410, %v408
        %v449 = vpack.c.b16 %v411, %v409
        %v450 = vpack.c.b16 %v414, %v412
        %v451 = vpack.c.b16 %v415, %v413
        %v452 = vpack.c.b16 %v418, %v416
        %v453 = vpack.c.b16 %v419, %v417
        %v454 = vpack.c.b16 %v422, %v420
        %v455 = vpack.c.b16 %v423, %v421
        %v491 = vunpack.c.l.b16 %v309
        %v492 = vunpack.c.l.b16 %v310
        %v493 = vunpack.c.l.b16 %v311
        %v494 = vunpack.c.l.b16 %v312
        %v495 = vunpack.c.l.b16 %v313
        %v496 = vunpack.c.l.b16 %v314
        %v497 = vunpack.c.l.b16 %v315
        %v498 = vunpack.c.l.b16 %v316
        %v499 = vunpack.c.l.b16 %v317
        %v500 = vunpack.c.l.b16 %v318
        %v501 = vunpack.c.l.b16 %v319
        %v502 = vunpack.c.l.b16 %v320
        %v503 = vunpack.c.l.b16 %v321
        %v504 = vunpack.c.l.b16 %v322
        %v505 = vunpack.c.l.b16 %v323
        %v506 = vunpack.c.l.b16 %v324
        %v507 = vunpack.c.l.b16 %v325
        %v508 = vunpack.c.l.b16 %v326
        %v509 = vunpack.c.l.b16 %v327
        %v510 = vpack.c.b16 %v492, %v491
        %v511 = vpack.c.b16 %v494, %v493
        %v512 = vpack.c.b16 %v496, %v495
        %v513 = vpack.c.b16 %v498, %v497
        %v514 = vpack.c.b16 %v500, %v499
        %v515 = vpack.c.b16 %v502, %v501
        %v516 = vpack.c.b16 %v504, %v503
        %v517 = vpack.c.b16 %v506, %v505
        %v518 = vpack.c.b16 %v508, %v507
        %v519 = vpack.c.b16 %v509, %v509
        %vm529 = vcmask 154624
        %v531 = vsel %vm529, %v425, 0
        %v534 = vsel %vm529, %v427, 0
        %v537 = vsel %vm529, %v429, 0
        %v540 = vsel %vm529, %v431, 0
        %v543 = vsel %vm529, %v433, 0
        %v546 = vsel %vm529, %v435, 0
        %v549 = vsel %vm529, %v437, 0
        %v552 = vsel %vm529, %v439, 0
        %v555 = vsel %vm529, %v441, 0
        %v558 = vsel %vm529, %v443, 0
        %v561 = vsel %vm529, %v445, 0
        %v564 = vsel %vm529, %v447, 0
        %v567 = vsel %vm529, %v449, 0
        %v570 = vsel %vm529, %v451, 0
        %v573 = vsel %vm529, %v453, 0
        %v576 = vsel %vm529, %v455, 0
        %vm578 = vcmask 1040384
        %vm579 = vcmask 1041408
        %v580 = vsel %vm578, 4294967295, 65535
        %v581 = vsel %vm579, %v580, 0
        %v583 = vand.u32 %v519, %v581
        %585 = vmatprep.subr.bf16.mxu0 0
        %586 = vmatpush1.bf16.msra.mxu0 %v517
        %587 = vmatprep.subr.bf16.mxu0 0
        %588 = vmatpush1.bf16.msra.mxu0 %v516
        %589 = vmatprep.subr.bf16.mxu0 0
        %590 = vmatpush1.bf16.msra.mxu0 %v515
        %591 = vmatprep.subr.bf16.mxu0 0
        %592 = vmatpush1.bf16.msra.mxu0 %v514
        %593 = vmatprep.subr.bf16.mxu0 0
        %594 = vmatpush1.bf16.msra.mxu0 %v513
        %595 = vmatprep.subr.bf16.mxu0 0
        %596 = vmatpush1.bf16.msra.mxu0 %v512
        %597 = vmatprep.subr.bf16.mxu0 0
        %598 = vmatpush1.bf16.msra.mxu0 %v511
        %599 = vmatprep.subr.bf16.mxu0 0
        %600 = vmatpush1.bf16.msra.mxu0 %v510
        %601 = vmatprep.subr.bf16.mxu0 0
        %602 = vmatpush2.bf16.msra.mxu0 0
        %603 = vmatprep.subr.bf16.mxu0 0
        %604 = vmatpush2.bf16.msra.mxu0 0
        %605 = vmatprep.subr.bf16.mxu0 0
        %606 = vmatpush2.bf16.msra.mxu0 0
        %607 = vmatprep.subr.bf16.mxu0 0
        %608 = vmatpush2.bf16.msra.mxu0 0
        %609 = vmatprep.subr.bf16.mxu0 0
        %610 = vmatpush2.bf16.msra.mxu0 0
        %611 = vmatprep.subr.bf16.mxu0 0
        %612 = vmatpush2.bf16.msra.mxu0 0
        %613 = vmatprep.subr.bf16.mxu0 0
        %614 = vmatpush2.bf16.msra.mxu0 %v583
        %615 = vmatprep.subr.bf16.mxu0 0
        %616 = vmatpush2.bf16.msra.mxu0 %v518
        %617 = vmatprep.mubr.bf16.mxu0 %v531
        %618 = vmatmul.mubr.bf16.gmra.mxu0 %v424
        %v619 = vpop.f32.mrf.mxu0
        %v620 = vadd.f32 0.0, %v619
        %v621 = vpop.f32.mrf.mxu0
        %v622 = vpop.f32.mrf.mxu0
        %v623 = vadd.f32 0.0, %v622
        %v624 = vpop.f32.mrf.mxu0
        %625 = vmatprep.mubr.bf16.mxu0 %v534
        %626 = vmatmul.mubr.bf16.gmra.mxu0 %v426
        %v627 = vpop.f32.mrf.mxu0
        %v628 = vadd.f32 0.0, %v627
        %v629 = vpop.f32.mrf.mxu0
        %v630 = vpop.f32.mrf.mxu0
        %v631 = vadd.f32 0.0, %v630
        %v632 = vpop.f32.mrf.mxu0
        %633 = vmatprep.mubr.bf16.mxu0 %v537
        %634 = vmatmul.mubr.bf16.gmra.mxu0 %v428
        %v635 = vpop.f32.mrf.mxu0
        %v636 = vadd.f32 0.0, %v635
        %v637 = vpop.f32.mrf.mxu0
        %v638 = vpop.f32.mrf.mxu0
        %v639 = vadd.f32 0.0, %v638
        %v640 = vpop.f32.mrf.mxu0
        %641 = vmatprep.mubr.bf16.mxu0 %v540
        %642 = vmatmul.mubr.bf16.gmra.mxu0 %v430
        %v643 = vpop.f32.mrf.mxu0
        %v644 = vadd.f32 0.0, %v643
        %v645 = vpop.f32.mrf.mxu0
        %v646 = vpop.f32.mrf.mxu0
        %v647 = vadd.f32 0.0, %v646
        %v648 = vpop.f32.mrf.mxu0
        %649 = vmatprep.mubr.bf16.mxu0 %v543
        %650 = vmatmul.mubr.bf16.gmra.mxu0 %v432
        %v651 = vpop.f32.mrf.mxu0
        %v652 = vadd.f32 0.0, %v651
        %v653 = vpop.f32.mrf.mxu0
        %v654 = vpop.f32.mrf.mxu0
        %v655 = vadd.f32 0.0, %v654
        %v656 = vpop.f32.mrf.mxu0
        %657 = vmatprep.mubr.bf16.mxu0 %v546
        %658 = vmatmul.mubr.bf16.gmra.mxu0 %v434
        %v659 = vpop.f32.mrf.mxu0
        %v660 = vadd.f32 0.0, %v659
        %v661 = vpop.f32.mrf.mxu0
        %v662 = vpop.f32.mrf.mxu0
        %v663 = vadd.f32 0.0, %v662
        %v664 = vpop.f32.mrf.mxu0
        %665 = vmatprep.mubr.bf16.mxu0 %v549
        %666 = vmatmul.mubr.bf16.gmra.mxu0 %v436
        %v667 = vpop.f32.mrf.mxu0
        %v668 = vadd.f32 0.0, %v667
        %v669 = vpop.f32.mrf.mxu0
        %v670 = vpop.f32.mrf.mxu0
        %v671 = vadd.f32 0.0, %v670
        %v672 = vpop.f32.mrf.mxu0
        %673 = vmatprep.mubr.bf16.mxu0 %v552
        %674 = vmatmul.mubr.bf16.gmra.mxu0 %v438
        %v675 = vpop.f32.mrf.mxu0
        %v676 = vadd.f32 0.0, %v675
        %v677 = vpop.f32.mrf.mxu0
        %v678 = vpop.f32.mrf.mxu0
        %v679 = vadd.f32 0.0, %v678
        %v680 = vpop.f32.mrf.mxu0
        %681 = vmatprep.mubr.bf16.mxu0 %v555
        %682 = vmatmul.mubr.bf16.gmra.mxu0 %v440
        %v683 = vpop.f32.mrf.mxu0
        %v684 = vadd.f32 0.0, %v683
        %v685 = vpop.f32.mrf.mxu0
        %v686 = vpop.f32.mrf.mxu0
        %v687 = vadd.f32 0.0, %v686
        %v688 = vpop.f32.mrf.mxu0
        %689 = vmatprep.mubr.bf16.mxu0 %v558
        %690 = vmatmul.mubr.bf16.gmra.mxu0 %v442
        %v691 = vpop.f32.mrf.mxu0
        %v692 = vadd.f32 0.0, %v691
        %v693 = vpop.f32.mrf.mxu0
        %v694 = vpop.f32.mrf.mxu0
        %v695 = vadd.f32 0.0, %v694
        %v696 = vpop.f32.mrf.mxu0
        %697 = vmatprep.mubr.bf16.mxu0 %v561
        %698 = vmatmul.mubr.bf16.gmra.mxu0 %v444
        %v699 = vpop.f32.mrf.mxu0
        %v700 = vadd.f32 0.0, %v699
        %v701 = vpop.f32.mrf.mxu0
        %v702 = vpop.f32.mrf.mxu0
        %v703 = vadd.f32 0.0, %v702
        %v704 = vpop.f32.mrf.mxu0
        %705 = vmatprep.mubr.bf16.mxu0 %v564
        %706 = vmatmul.mubr.bf16.gmra.mxu0 %v446
        %v707 = vpop.f32.mrf.mxu0
        %v708 = vadd.f32 0.0, %v707
        %v709 = vpop.f32.mrf.mxu0
        %v710 = vpop.f32.mrf.mxu0
        %v711 = vadd.f32 0.0, %v710
        %v712 = vpop.f32.mrf.mxu0
        %713 = vmatprep.mubr.bf16.mxu0 %v567
        %714 = vmatmul.mubr.bf16.gmra.mxu0 %v448
        %v715 = vpop.f32.mrf.mxu0
        %v716 = vadd.f32 0.0, %v715
        %v717 = vpop.f32.mrf.mxu0
        %v718 = vpop.f32.mrf.mxu0
        %v719 = vadd.f32 0.0, %v718
        %v720 = vpop.f32.mrf.mxu0
        %721 = vmatprep.mubr.bf16.mxu0 %v570
        %722 = vmatmul.mubr.bf16.gmra.mxu0 %v450
        %v723 = vpop.f32.mrf.mxu0
        %v724 = vadd.f32 0.0, %v723
        %v725 = vpop.f32.mrf.mxu0
        %v726 = vpop.f32.mrf.mxu0
        %v727 = vadd.f32 0.0, %v726
        %v728 = vpop.f32.mrf.mxu0
        %729 = vmatprep.mubr.bf16.mxu0 %v573
        %730 = vmatmul.mubr.bf16.gmra.mxu0 %v452
        %v731 = vpop.f32.mrf.mxu0
        %v732 = vadd.f32 0.0, %v731
        %v733 = vpop.f32.mrf.mxu0
        %v734 = vpop.f32.mrf.mxu0
        %v735 = vadd.f32 0.0, %v734
        %v736 = vpop.f32.mrf.mxu0
        %737 = vmatprep.mubr.bf16.mxu0 %v576
        %738 = vmatmul.mubr.bf16.gmra.mxu0 %v454
        %v739 = vpop.f32.mrf.mxu0
        %v740 = vadd.f32 0.0, %v739
        %v741 = vpop.f32.mrf.mxu0
        %v742 = vpop.f32.mrf.mxu0
        %v743 = vadd.f32 0.0, %v742
        %v744 = vpop.f32.mrf.mxu0
        %745 = vdwg.mxu0
        %v746 = vld [vmem:[%s2] sm:$0x1]
        %v748 = vlaneseq
        %v749 = vshrl.u32 %v748, 7
        %v750 = vsub.s32 0, %v749
        %v751 = vrot.slane %v746, %v750
        %v753 = vmul.f32 %v620, %v751
        %v754 = vmul.f32 %v623, %v751
        %v755 = vmul.f32 %v628, %v751
        %v756 = vmul.f32 %v631, %v751
        %v757 = vmul.f32 %v636, %v751
        %v758 = vmul.f32 %v639, %v751
        %v759 = vmul.f32 %v644, %v751
        %v760 = vmul.f32 %v647, %v751
        %v761 = vmul.f32 %v652, %v751
        %v762 = vmul.f32 %v655, %v751
        %v763 = vmul.f32 %v660, %v751
        %v764 = vmul.f32 %v663, %v751
        %v765 = vmul.f32 %v668, %v751
        %v766 = vmul.f32 %v671, %v751
        %v767 = vmul.f32 %v676, %v751
        %v768 = vmul.f32 %v679, %v751
        %v769 = vmul.f32 %v684, %v751
        %v770 = vmul.f32 %v687, %v751
        %v771 = vmul.f32 %v692, %v751
        %v772 = vmul.f32 %v695, %v751
        %v773 = vmul.f32 %v700, %v751
        %v774 = vmul.f32 %v703, %v751
        %v775 = vmul.f32 %v708, %v751
        %v776 = vmul.f32 %v711, %v751
        %v777 = vmul.f32 %v716, %v751
        %v778 = vmul.f32 %v719, %v751
        %v779 = vmul.f32 %v724, %v751
        %v780 = vmul.f32 %v727, %v751
        %v781 = vmul.f32 %v732, %v751
        %v782 = vmul.f32 %v735, %v751
        %v783 = vmul.f32 %v740, %v751
        %v784 = vmul.f32 %v743, %v751
        %v785 = vld [vmem:[%s3] sm:$0x1]
        %v787 = vlaneseq
        %v788 = vshrl.u32 %v787, 7
        %v789 = vsub.s32 0, %v788
        %v790 = vrot.slane %v785, %v789
        %v792 = vadd.f32 %v753, %v790
        %v793 = vadd.f32 %v754, %v790
        %v794 = vadd.f32 %v755, %v790
        %v795 = vadd.f32 %v756, %v790
        %v796 = vadd.f32 %v757, %v790
        %v797 = vadd.f32 %v758, %v790
        %v798 = vadd.f32 %v759, %v790
        %v799 = vadd.f32 %v760, %v790
        %v800 = vadd.f32 %v761, %v790
        %v801 = vadd.f32 %v762, %v790
        %v802 = vadd.f32 %v763, %v790
        %v803 = vadd.f32 %v764, %v790
        %v804 = vadd.f32 %v765, %v790
        %v805 = vadd.f32 %v766, %v790
        %v806 = vadd.f32 %v767, %v790
        %v807 = vadd.f32 %v768, %v790
        %v808 = vadd.f32 %v769, %v790
        %v809 = vadd.f32 %v770, %v790
        %v810 = vadd.f32 %v771, %v790
        %v811 = vadd.f32 %v772, %v790
        %v812 = vadd.f32 %v773, %v790
        %v813 = vadd.f32 %v774, %v790
        %v814 = vadd.f32 %v775, %v790
        %v815 = vadd.f32 %v776, %v790
        %v816 = vadd.f32 %v777, %v790
        %v817 = vadd.f32 %v778, %v790
        %v818 = vadd.f32 %v779, %v790
        %v819 = vadd.f32 %v780, %v790
        %v820 = vadd.f32 %v781, %v790
        %v821 = vadd.f32 %v782, %v790
        %v822 = vadd.f32 %v783, %v790
        %v823 = vadd.f32 %v784, %v790
        %v824 = vpack.c.bf16 %v623, %v620
        %v825 = vpack.c.bf16 %v631, %v628
        %v826 = vpack.c.bf16 %v639, %v636
        %v827 = vpack.c.bf16 %v647, %v644
        %v828 = vpack.c.bf16 %v655, %v652
        %v829 = vpack.c.bf16 %v663, %v660
        %v830 = vpack.c.bf16 %v671, %v668
        %v831 = vpack.c.bf16 %v679, %v676
        %v832 = vpack.c.bf16 %v687, %v684
        %v833 = vpack.c.bf16 %v695, %v692
        %v834 = vpack.c.bf16 %v703, %v700
        %v835 = vpack.c.bf16 %v711, %v708
        %v836 = vpack.c.bf16 %v719, %v716
        %v837 = vpack.c.bf16 %v727, %v724
        %v838 = vpack.c.bf16 %v735, %v732
        %v839 = vpack.c.bf16 %v743, %v740
        %v856 = vunpack.c.l.b16 %v824
        %v857 = vunpack.c.h.b16 %v824
        %v858 = vunpack.c.l.b16 %v825
        %v859 = vunpack.c.h.b16 %v825
        %v860 = vunpack.c.l.b16 %v826
        %v861 = vunpack.c.h.b16 %v826
        %v862 = vunpack.c.l.b16 %v827
        %v863 = vunpack.c.h.b16 %v827
        %v864 = vunpack.c.l.b16 %v828
        %v865 = vunpack.c.h.b16 %v828
        %v866 = vunpack.c.l.b16 %v829
        %v867 = vunpack.c.h.b16 %v829
        %v868 = vunpack.c.l.b16 %v830
        %v869 = vunpack.c.h.b16 %v830
        %v870 = vunpack.c.l.b16 %v831
        %v871 = vunpack.c.h.b16 %v831
        %v872 = vunpack.c.l.b16 %v832
        %v873 = vunpack.c.h.b16 %v832
        %v874 = vunpack.c.l.b16 %v833
        %v875 = vunpack.c.h.b16 %v833
        %v876 = vunpack.c.l.b16 %v834
        %v877 = vunpack.c.h.b16 %v834
        %v878 = vunpack.c.l.b16 %v835
        %v879 = vunpack.c.h.b16 %v835
        %v880 = vunpack.c.l.b16 %v836
        %v881 = vunpack.c.h.b16 %v836
        %v882 = vunpack.c.l.b16 %v837
        %v883 = vunpack.c.h.b16 %v837
        %v884 = vunpack.c.l.b16 %v838
        %v885 = vunpack.c.h.b16 %v838
        %v886 = vunpack.c.l.b16 %v839
        %v887 = vunpack.c.h.b16 %v839
        %v888 = vpack.c.b16 %v856, %v856
        %v889 = vpack.c.b16 %v857, %v857
        %v890 = vpack.c.b16 %v858, %v858
        %v891 = vpack.c.b16 %v859, %v859
        %v892 = vpack.c.b16 %v860, %v860
        %v893 = vpack.c.b16 %v861, %v861
        %v894 = vpack.c.b16 %v862, %v862
        %v895 = vpack.c.b16 %v863, %v863
        %v896 = vpack.c.b16 %v864, %v864
        %v897 = vpack.c.b16 %v865, %v865
        %v898 = vpack.c.b16 %v866, %v866
        %v899 = vpack.c.b16 %v867, %v867
        %v900 = vpack.c.b16 %v868, %v868
        %v901 = vpack.c.b16 %v869, %v869
        %v902 = vpack.c.b16 %v870, %v870
        %v903 = vpack.c.b16 %v871, %v871
        %v904 = vpack.c.b16 %v872, %v872
        %v905 = vpack.c.b16 %v873, %v873
        %v906 = vpack.c.b16 %v874, %v874
        %v907 = vpack.c.b16 %v875, %v875
        %v908 = vpack.c.b16 %v876, %v876
        %v909 = vpack.c.b16 %v877, %v877
        %v910 = vpack.c.b16 %v878, %v878
        %v911 = vpack.c.b16 %v879, %v879
        %v912 = vpack.c.b16 %v880, %v880
        %v913 = vpack.c.b16 %v881, %v881
        %v914 = vpack.c.b16 %v882, %v882
        %v915 = vpack.c.b16 %v883, %v883
        %v916 = vpack.c.b16 %v884, %v884
        %v917 = vpack.c.b16 %v885, %v885
        %v918 = vpack.c.b16 %v886, %v886
        %v919 = vpack.c.b16 %v887, %v887
        %vm952 = vcmask 519168
        %953 = vst.msk [vmem:[%s251] sm:$0xf] %vm952, %v888
        %954 = vst.msk [vmem:[%s251 + $0x4] sm:$0xf] %vm952, %v889
        %955 = vst.msk [vmem:[%s251 + $0x8] sm:$0xf] %vm952, %v890
        %956 = vst.msk [vmem:[%s251 + $0xc] sm:$0xf] %vm952, %v891
        %957 = vst.msk [vmem:[%s251 + $0x10] sm:$0xf] %vm952, %v892
        %958 = vst.msk [vmem:[%s251 + $0x14] sm:$0xf] %vm952, %v893
        %959 = vst.msk [vmem:[%s251 + $0x18] sm:$0xf] %vm952, %v894
        %960 = vst.msk [vmem:[%s251 + $0x1c] sm:$0xf] %vm952, %v895
        %961 = vst.msk [vmem:[%s251 + $0x20] sm:$0xf] %vm952, %v896
        %962 = vst.msk [vmem:[%s251 + $0x24] sm:$0xf] %vm952, %v897
        %963 = vst.msk [vmem:[%s251 + $0x28] sm:$0xf] %vm952, %v898
        %964 = vst.msk [vmem:[%s251 + $0x2c] sm:$0xf] %vm952, %v899
        %965 = vst.msk [vmem:[%s251 + $0x30] sm:$0xf] %vm952, %v900
        %966 = vst.msk [vmem:[%s251 + $0x34] sm:$0xf] %vm952, %v901
        %967 = vst.msk [vmem:[%s251 + $0x38] sm:$0xf] %vm952, %v902
        %968 = vst.msk [vmem:[%s251 + $0x3c] sm:$0xf] %vm952, %v903
        %969 = vst.msk [vmem:[%s251 + $0x40] sm:$0xf] %vm952, %v904
        %970 = vst.msk [vmem:[%s251 + $0x44] sm:$0xf] %vm952, %v905
        %971 = vst.msk [vmem:[%s251 + $0x48] sm:$0xf] %vm952, %v906
        %972 = vst.msk [vmem:[%s251 + $0x4c] sm:$0xf] %vm952, %v907
        %973 = vst.msk [vmem:[%s251 + $0x50] sm:$0xf] %vm952, %v908
        %974 = vst.msk [vmem:[%s251 + $0x54] sm:$0xf] %vm952, %v909
        %975 = vst.msk [vmem:[%s251 + $0x58] sm:$0xf] %vm952, %v910
        %976 = vst.msk [vmem:[%s251 + $0x5c] sm:$0xf] %vm952, %v911
        %977 = vst.msk [vmem:[%s251 + $0x60] sm:$0xf] %vm952, %v912
        %978 = vst.msk [vmem:[%s251 + $0x64] sm:$0xf] %vm952, %v913
        %979 = vst.msk [vmem:[%s251 + $0x68] sm:$0xf] %vm952, %v914
        %980 = vst.msk [vmem:[%s251 + $0x6c] sm:$0xf] %vm952, %v915
        %981 = vst.msk [vmem:[%s251 + $0x70] sm:$0xf] %vm952, %v916
        %982 = vst.msk [vmem:[%s251 + $0x74] sm:$0xf] %vm952, %v917
        %983 = vst.msk [vmem:[%s251 + $0x78] sm:$0xf] %vm952, %v918
        %984 = vst.msk [vmem:[%s251 + $0x7c] sm:$0xf] %vm952, %v919
        %v985 = vpack.c.bf16 %v793, %v792
        %v986 = vpack.c.bf16 %v795, %v794
        %v987 = vpack.c.bf16 %v797, %v796
        %v988 = vpack.c.bf16 %v799, %v798
        %v989 = vpack.c.bf16 %v801, %v800
        %v990 = vpack.c.bf16 %v803, %v802
        %v991 = vpack.c.bf16 %v805, %v804
        %v992 = vpack.c.bf16 %v807, %v806
        %v993 = vpack.c.bf16 %v809, %v808
        %v994 = vpack.c.bf16 %v811, %v810
        %v995 = vpack.c.bf16 %v813, %v812
        %v996 = vpack.c.bf16 %v815, %v814
        %v997 = vpack.c.bf16 %v817, %v816
        %v998 = vpack.c.bf16 %v819, %v818
        %v999 = vpack.c.bf16 %v821, %v820
        %v1000 = vpack.c.bf16 %v823, %v822
        %v1017 = vunpack.c.l.b16 %v985
        %v1018 = vunpack.c.h.b16 %v985
        %v1019 = vunpack.c.l.b16 %v986
        %v1020 = vunpack.c.h.b16 %v986
        %v1021 = vunpack.c.l.b16 %v987
        %v1022 = vunpack.c.h.b16 %v987
        %v1023 = vunpack.c.l.b16 %v988
        %v1024 = vunpack.c.h.b16 %v988
        %v1025 = vunpack.c.l.b16 %v989
        %v1026 = vunpack.c.h.b16 %v989
        %v1027 = vunpack.c.l.b16 %v990
        %v1028 = vunpack.c.h.b16 %v990
        %v1029 = vunpack.c.l.b16 %v991
        %v1030 = vunpack.c.h.b16 %v991
        %v1031 = vunpack.c.l.b16 %v992
        %v1032 = vunpack.c.h.b16 %v992
        %v1033 = vunpack.c.l.b16 %v993
        %v1034 = vunpack.c.h.b16 %v993
        %v1035 = vunpack.c.l.b16 %v994
        %v1036 = vunpack.c.h.b16 %v994
        %v1037 = vunpack.c.l.b16 %v995
        %v1038 = vunpack.c.h.b16 %v995
        %v1039 = vunpack.c.l.b16 %v996
        %v1040 = vunpack.c.h.b16 %v996
        %v1041 = vunpack.c.l.b16 %v997
        %v1042 = vunpack.c.h.b16 %v997
        %v1043 = vunpack.c.l.b16 %v998
        %v1044 = vunpack.c.h.b16 %v998
        %v1045 = vunpack.c.l.b16 %v999
        %v1046 = vunpack.c.h.b16 %v999
        %v1047 = vunpack.c.l.b16 %v1000
        %v1048 = vunpack.c.h.b16 %v1000
        %v1049 = vpack.c.b16 %v1017, %v1017
        %v1050 = vpack.c.b16 %v1018, %v1018
        %v1051 = vpack.c.b16 %v1019, %v1019
        %v1052 = vpack.c.b16 %v1020, %v1020
        %v1053 = vpack.c.b16 %v1021, %v1021
        %v1054 = vpack.c.b16 %v1022, %v1022
        %v1055 = vpack.c.b16 %v1023, %v1023
        %v1056 = vpack.c.b16 %v1024, %v1024
        %v1057 = vpack.c.b16 %v1025, %v1025
        %v1058 = vpack.c.b16 %v1026, %v1026
        %v1059 = vpack.c.b16 %v1027, %v1027
        %v1060 = vpack.c.b16 %v1028, %v1028
        %v1061 = vpack.c.b16 %v1029, %v1029
        %v1062 = vpack.c.b16 %v1030, %v1030
        %v1063 = vpack.c.b16 %v1031, %v1031
        %v1064 = vpack.c.b16 %v1032, %v1032
        %v1065 = vpack.c.b16 %v1033, %v1033
        %v1066 = vpack.c.b16 %v1034, %v1034
        %v1067 = vpack.c.b16 %v1035, %v1035
        %v1068 = vpack.c.b16 %v1036, %v1036
        %v1069 = vpack.c.b16 %v1037, %v1037
        %v1070 = vpack.c.b16 %v1038, %v1038
        %v1071 = vpack.c.b16 %v1039, %v1039
        %v1072 = vpack.c.b16 %v1040, %v1040
        %v1073 = vpack.c.b16 %v1041, %v1041
        %v1074 = vpack.c.b16 %v1042, %v1042
        %v1075 = vpack.c.b16 %v1043, %v1043
        %v1076 = vpack.c.b16 %v1044, %v1044
        %v1077 = vpack.c.b16 %v1045, %v1045
        %v1078 = vpack.c.b16 %v1046, %v1046
        %v1079 = vpack.c.b16 %v1047, %v1047
        %v1080 = vpack.c.b16 %v1048, %v1048
        %1113 = vst.msk [vmem:[%s258] sm:$0xf] %vm952, %v1049
        %1114 = vst.msk [vmem:[%s258 + $0x4] sm:$0xf] %vm952, %v1050
        %1115 = vst.msk [vmem:[%s258 + $0x8] sm:$0xf] %vm952, %v1051
        %1116 = vst.msk [vmem:[%s258 + $0xc] sm:$0xf] %vm952, %v1052
        %1117 = vst.msk [vmem:[%s258 + $0x10] sm:$0xf] %vm952, %v1053
        %1118 = vst.msk [vmem:[%s258 + $0x14] sm:$0xf] %vm952, %v1054
        %1119 = vst.msk [vmem:[%s258 + $0x18] sm:$0xf] %vm952, %v1055
        %1120 = vst.msk [vmem:[%s258 + $0x1c] sm:$0xf] %vm952, %v1056
        %1121 = vst.msk [vmem:[%s258 + $0x20] sm:$0xf] %vm952, %v1057
        %1122 = vst.msk [vmem:[%s258 + $0x24] sm:$0xf] %vm952, %v1058
        %1123 = vst.msk [vmem:[%s258 + $0x28] sm:$0xf] %vm952, %v1059
        %1124 = vst.msk [vmem:[%s258 + $0x2c] sm:$0xf] %vm952, %v1060
        %1125 = vst.msk [vmem:[%s258 + $0x30] sm:$0xf] %vm952, %v1061
        %1126 = vst.msk [vmem:[%s258 + $0x34] sm:$0xf] %vm952, %v1062
        %1127 = vst.msk [vmem:[%s258 + $0x38] sm:$0xf] %vm952, %v1063
        %1128 = vst.msk [vmem:[%s258 + $0x3c] sm:$0xf] %vm952, %v1064
        %1129 = vst.msk [vmem:[%s258 + $0x40] sm:$0xf] %vm952, %v1065
        %1130 = vst.msk [vmem:[%s258 + $0x44] sm:$0xf] %vm952, %v1066
        %1131 = vst.msk [vmem:[%s258 + $0x48] sm:$0xf] %vm952, %v1067
        %1132 = vst.msk [vmem:[%s258 + $0x4c] sm:$0xf] %vm952, %v1068
        %1133 = vst.msk [vmem:[%s258 + $0x50] sm:$0xf] %vm952, %v1069
        %1134 = vst.msk [vmem:[%s258 + $0x54] sm:$0xf] %vm952, %v1070
        %1135 = vst.msk [vmem:[%s258 + $0x58] sm:$0xf] %vm952, %v1071
        %1136 = vst.msk [vmem:[%s258 + $0x5c] sm:$0xf] %vm952, %v1072
        %1137 = vst.msk [vmem:[%s258 + $0x60] sm:$0xf] %vm952, %v1073
        %1138 = vst.msk [vmem:[%s258 + $0x64] sm:$0xf] %vm952, %v1074
        %1139 = vst.msk [vmem:[%s258 + $0x68] sm:$0xf] %vm952, %v1075
        %1140 = vst.msk [vmem:[%s258 + $0x6c] sm:$0xf] %vm952, %v1076
        %1141 = vst.msk [vmem:[%s258 + $0x70] sm:$0xf] %vm952, %v1077
        %1142 = vst.msk [vmem:[%s258 + $0x74] sm:$0xf] %vm952, %v1078
        %1143 = vst.msk [vmem:[%s258 + $0x78] sm:$0xf] %vm952, %v1079
        %1144 = vst.msk [vmem:[%s258 + $0x7c] sm:$0xf] %vm952, %v1080
        %v1145 = vmax.f32 %v792, 0.0
        %v1146 = vmax.f32 %v793, 0.0
        %v1147 = vmax.f32 %v794, 0.0
        %v1148 = vmax.f32 %v795, 0.0
        %v1149 = vmax.f32 %v796, 0.0
        %v1150 = vmax.f32 %v797, 0.0
        %v1151 = vmax.f32 %v798, 0.0
        %v1152 = vmax.f32 %v799, 0.0
        %v1153 = vmax.f32 %v800, 0.0
        %v1154 = vmax.f32 %v801, 0.0
        %v1155 = vmax.f32 %v802, 0.0
        %v1156 = vmax.f32 %v803, 0.0
        %v1157 = vmax.f32 %v804, 0.0
        %v1158 = vmax.f32 %v805, 0.0
        %v1159 = vmax.f32 %v806, 0.0
        %v1160 = vmax.f32 %v807, 0.0
        %v1161 = vmax.f32 %v808, 0.0
        %v1162 = vmax.f32 %v809, 0.0
        %v1163 = vmax.f32 %v810, 0.0
        %v1164 = vmax.f32 %v811, 0.0
        %v1165 = vmax.f32 %v812, 0.0
        %v1166 = vmax.f32 %v813, 0.0
        %v1167 = vmax.f32 %v814, 0.0
        %v1168 = vmax.f32 %v815, 0.0
        %v1169 = vmax.f32 %v816, 0.0
        %v1170 = vmax.f32 %v817, 0.0
        %v1171 = vmax.f32 %v818, 0.0
        %v1172 = vmax.f32 %v819, 0.0
        %v1173 = vmax.f32 %v820, 0.0
        %v1174 = vmax.f32 %v821, 0.0
        %v1175 = vmax.f32 %v822, 0.0
        %v1176 = vmax.f32 %v823, 0.0
        %v1177 = vpack.c.bf16 %v1146, %v1145
        %v1178 = vpack.c.bf16 %v1148, %v1147
        %v1179 = vpack.c.bf16 %v1150, %v1149
        %v1180 = vpack.c.bf16 %v1152, %v1151
        %v1181 = vpack.c.bf16 %v1154, %v1153
        %v1182 = vpack.c.bf16 %v1156, %v1155
        %v1183 = vpack.c.bf16 %v1158, %v1157
        %v1184 = vpack.c.bf16 %v1160, %v1159
        %v1185 = vpack.c.bf16 %v1162, %v1161
        %v1186 = vpack.c.bf16 %v1164, %v1163
        %v1187 = vpack.c.bf16 %v1166, %v1165
        %v1188 = vpack.c.bf16 %v1168, %v1167
        %v1189 = vpack.c.bf16 %v1170, %v1169
        %v1190 = vpack.c.bf16 %v1172, %v1171
        %v1191 = vpack.c.bf16 %v1174, %v1173
        %v1192 = vpack.c.bf16 %v1176, %v1175
        %v1209 = vunpack.c.l.b16 %v1177
        %v1210 = vunpack.c.h.b16 %v1177
        %v1211 = vunpack.c.l.b16 %v1178
        %v1212 = vunpack.c.h.b16 %v1178
        %v1213 = vunpack.c.l.b16 %v1179
        %v1214 = vunpack.c.h.b16 %v1179
        %v1215 = vunpack.c.l.b16 %v1180
        %v1216 = vunpack.c.h.b16 %v1180
        %v1217 = vunpack.c.l.b16 %v1181
        %v1218 = vunpack.c.h.b16 %v1181
        %v1219 = vunpack.c.l.b16 %v1182
        %v1220 = vunpack.c.h.b16 %v1182
        %v1221 = vunpack.c.l.b16 %v1183
        %v1222 = vunpack.c.h.b16 %v1183
        %v1223 = vunpack.c.l.b16 %v1184
        %v1224 = vunpack.c.h.b16 %v1184
        %v1225 = vunpack.c.l.b16 %v1185
        %v1226 = vunpack.c.h.b16 %v1185
        %v1227 = vunpack.c.l.b16 %v1186
        %v1228 = vunpack.c.h.b16 %v1186
        %v1229 = vunpack.c.l.b16 %v1187
        %v1230 = vunpack.c.h.b16 %v1187
        %v1231 = vunpack.c.l.b16 %v1188
        %v1232 = vunpack.c.h.b16 %v1188
        %v1233 = vunpack.c.l.b16 %v1189
        %v1234 = vunpack.c.h.b16 %v1189
        %v1235 = vunpack.c.l.b16 %v1190
        %v1236 = vunpack.c.h.b16 %v1190
        %v1237 = vunpack.c.l.b16 %v1191
        %v1238 = vunpack.c.h.b16 %v1191
        %v1239 = vunpack.c.l.b16 %v1192
        %v1240 = vunpack.c.h.b16 %v1192
        %v1241 = vpack.c.b16 %v1209, %v1209
        %v1242 = vpack.c.b16 %v1210, %v1210
        %v1243 = vpack.c.b16 %v1211, %v1211
        %v1244 = vpack.c.b16 %v1212, %v1212
        %v1245 = vpack.c.b16 %v1213, %v1213
        %v1246 = vpack.c.b16 %v1214, %v1214
        %v1247 = vpack.c.b16 %v1215, %v1215
        %v1248 = vpack.c.b16 %v1216, %v1216
        %v1249 = vpack.c.b16 %v1217, %v1217
        %v1250 = vpack.c.b16 %v1218, %v1218
        %v1251 = vpack.c.b16 %v1219, %v1219
        %v1252 = vpack.c.b16 %v1220, %v1220
        %v1253 = vpack.c.b16 %v1221, %v1221
        %v1254 = vpack.c.b16 %v1222, %v1222
        %v1255 = vpack.c.b16 %v1223, %v1223
        %v1256 = vpack.c.b16 %v1224, %v1224
        %v1257 = vpack.c.b16 %v1225, %v1225
        %v1258 = vpack.c.b16 %v1226, %v1226
        %v1259 = vpack.c.b16 %v1227, %v1227
        %v1260 = vpack.c.b16 %v1228, %v1228
        %v1261 = vpack.c.b16 %v1229, %v1229
        %v1262 = vpack.c.b16 %v1230, %v1230
        %v1263 = vpack.c.b16 %v1231, %v1231
        %v1264 = vpack.c.b16 %v1232, %v1232
        %v1265 = vpack.c.b16 %v1233, %v1233
        %v1266 = vpack.c.b16 %v1234, %v1234
        %v1267 = vpack.c.b16 %v1235, %v1235
        %v1268 = vpack.c.b16 %v1236, %v1236
        %v1269 = vpack.c.b16 %v1237, %v1237
        %v1270 = vpack.c.b16 %v1238, %v1238
        %v1271 = vpack.c.b16 %v1239, %v1239
        %v1272 = vpack.c.b16 %v1240, %v1240
        %1305 = vst.msk [vmem:[%s265] sm:$0xf] %vm952, %v1241
        %1306 = vst.msk [vmem:[%s265 + $0x4] sm:$0xf] %vm952, %v1242
        %1307 = vst.msk [vmem:[%s265 + $0x8] sm:$0xf] %vm952, %v1243
        %1308 = vst.msk [vmem:[%s265 + $0xc] sm:$0xf] %vm952, %v1244
        %1309 = vst.msk [vmem:[%s265 + $0x10] sm:$0xf] %vm952, %v1245
        %1310 = vst.msk [vmem:[%s265 + $0x14] sm:$0xf] %vm952, %v1246
        %1311 = vst.msk [vmem:[%s265 + $0x18] sm:$0xf] %vm952, %v1247
        %1312 = vst.msk [vmem:[%s265 + $0x1c] sm:$0xf] %vm952, %v1248
        %1313 = vst.msk [vmem:[%s265 + $0x20] sm:$0xf] %vm952, %v1249
        %1314 = vst.msk [vmem:[%s265 + $0x24] sm:$0xf] %vm952, %v1250
        %1315 = vst.msk [vmem:[%s265 + $0x28] sm:$0xf] %vm952, %v1251
        %1316 = vst.msk [vmem:[%s265 + $0x2c] sm:$0xf] %vm952, %v1252
        %1317 = vst.msk [vmem:[%s265 + $0x30] sm:$0xf] %vm952, %v1253
        %1318 = vst.msk [vmem:[%s265 + $0x34] sm:$0xf] %vm952, %v1254
        %1319 = vst.msk [vmem:[%s265 + $0x38] sm:$0xf] %vm952, %v1255
        %1320 = vst.msk [vmem:[%s265 + $0x3c] sm:$0xf] %vm952, %v1256
        %1321 = vst.msk [vmem:[%s265 + $0x40] sm:$0xf] %vm952, %v1257
        %1322 = vst.msk [vmem:[%s265 + $0x44] sm:$0xf] %vm952, %v1258
        %1323 = vst.msk [vmem:[%s265 + $0x48] sm:$0xf] %vm952, %v1259
        %1324 = vst.msk [vmem:[%s265 + $0x4c] sm:$0xf] %vm952, %v1260
        %1325 = vst.msk [vmem:[%s265 + $0x50] sm:$0xf] %vm952, %v1261
        %1326 = vst.msk [vmem:[%s265 + $0x54] sm:$0xf] %vm952, %v1262
        %1327 = vst.msk [vmem:[%s265 + $0x58] sm:$0xf] %vm952, %v1263
        %1328 = vst.msk [vmem:[%s265 + $0x5c] sm:$0xf] %vm952, %v1264
        %1329 = vst.msk [vmem:[%s265 + $0x60] sm:$0xf] %vm952, %v1265
        %1330 = vst.msk [vmem:[%s265 + $0x64] sm:$0xf] %vm952, %v1266
        %1331 = vst.msk [vmem:[%s265 + $0x68] sm:$0xf] %vm952, %v1267
        %1332 = vst.msk [vmem:[%s265 + $0x6c] sm:$0xf] %vm952, %v1268
        %1333 = vst.msk [vmem:[%s265 + $0x70] sm:$0xf] %vm952, %v1269
        %1334 = vst.msk [vmem:[%s265 + $0x74] sm:$0xf] %vm952, %v1270
        %1335 = vst.msk [vmem:[%s265 + $0x78] sm:$0xf] %vm952, %v1271
        %1336 = vst.msk [vmem:[%s265 + $0x7c] sm:$0xf] %vm952, %v1272
        %s1337 = sand.u32 %s121, 1
        %s1338 = scalar_lea.sflag [#allocation3], %s1337
        %s1339 = sand.u32 %s121, 1
        %s1340 = smul.addr %s1339, 128
        %s1341 = scalar_lea.vmem [#allocation2], %s1340
        %s1342 = sand.u32 %s24, 1
        %s1343 = scalar_lea.sflag [#allocation5], %s1342
        %s1344 = sand.u32 %s147, 1
        %s1345 = smul.addr %s1344, 128
        %s1346 = scalar_lea.vmem [#allocation4], %s1345
        %s1347 = sand.u32 %s24, 1
        %s1348 = scalar_lea.sflag [#allocation5], %s1347
        %s1349 = sand.u32 %s173, 1
        %s1350 = smul.addr %s1349, 128
        %s1351 = scalar_lea.vmem [#allocation6], %s1350
        // Predicated region
        $region37: #{stem_conv_bn_relu.1} parent=35 // pred_check
          %p1352 = pneg %p131
        $region38: #{stem_conv_bn_relu.1} parent=35 // pred_check_branch
          %1354 = sbr.rel (%p1352) target = $region40
        $region39: #{stem_conv_bn_relu.1} parent=35 // pred_region
          %s1355 = smul.u32 32, %s24
          %s1357 = ssub.s32 2048, 2048
          %1358 = vsyncadd %s1338, %s1357
          %s1359 = smul.addr %s1355, 64
          %s1360 = scalar_lea.hbm %s4, %s1359
          %s1361 = sshll.u32 %s1341, 4
          %s1362 = int_to_ptr.vmem [resolvable:$true] %s1361
          %1367 = dma.vmem_to_hbm [thread:$0]  %s1362, 2048, %s1360, %s1338, 64, 64, 4
        $region40: #{stem_conv_bn_relu.1} parent=35 // pred_fallthru
          _
        // Predicated region
        $region41: #{stem_conv_bn_relu.1} parent=35 // pred_check
          %p1368 = pneg %p157
        $region42: #{stem_conv_bn_relu.1} parent=35 // pred_check_branch
          %1370 = sbr.rel (%p1368) target = $region44
        $region43: #{stem_conv_bn_relu.1} parent=35 // pred_region
          %s1371 = smul.u32 32, %s24
          %s1373 = ssub.s32 2048, 2048
          %1374 = vsyncadd %s1343, %s1373
          %s1375 = smul.addr %s1371, 64
          %s1376 = scalar_lea.hbm %s5, %s1375
          %s1377 = sshll.u32 %s1346, 4
          %s1378 = int_to_ptr.vmem [resolvable:$true] %s1377
          %1383 = dma.vmem_to_hbm [thread:$0]  %s1378, 2048, %s1376, %s1343, 64, 64, 4
        $region44: #{stem_conv_bn_relu.1} parent=35 // pred_fallthru
          _
        // Predicated region
        $region45: #{stem_conv_bn_relu.1} parent=35 // pred_check
          %p1384 = pneg %p183
        $region46: #{stem_conv_bn_relu.1} parent=35 // pred_check_branch
          %1386 = sbr.rel (%p1384) target = $region48
        $region47: #{stem_conv_bn_relu.1} parent=35 // pred_region
          %s1387 = smul.u32 32, %s24
          %s1389 = ssub.s32 2048, 2048
          %1390 = vsyncadd %s1348, %s1389
          %s1391 = smul.addr %s1387, 64
          %s1392 = scalar_lea.hbm %s6, %s1391
          %s1393 = sshll.u32 %s1351, 4
          %s1394 = int_to_ptr.vmem [resolvable:$true] %s1393
          %1399 = dma.vmem_to_hbm [thread:$0]  %s1394, 2048, %s1392, %s1348, 64, 64, 4
        $region48: #{stem_conv_bn_relu.1} parent=35 // pred_fallthru
          _
      $region36: #{stem_conv_bn_relu.1} parent=5 // pred_fallthru
        _
      %p1400 = scmp.le.s32.totalorder 2, %s19
      // Predicated region
      $region49: #{stem_conv_bn_relu.1} parent=5 // pred_check
        %p1401 = pneg %p1400
      $region50: #{stem_conv_bn_relu.1} parent=5 // pred_check_branch
        %1403 = sbr.rel (%p1401) target = $region52
      $region51: #{stem_conv_bn_relu.1} parent=5 // pred_region
        %s1404 = ssub.s32 %s19, 2
        // Predicated region
        $region53: #{stem_conv_bn_relu.1} parent=51 // pred_check
          %p1405 = pneg %p137
        $region54: #{stem_conv_bn_relu.1} parent=51 // pred_check_branch
          %1407 = sbr.rel (%p1405) target = $region56
        $region55: #{stem_conv_bn_relu.1} parent=51 // pred_region
          %s1408 = sand.u32 %s122, 1
          %s1409 = scalar_lea.sflag [#allocation3], %s1408
          %s1410 = sand.u32 %s122, 1
          %s1411 = smul.addr %s1410, 128
          %s1412 = scalar_lea.vmem [#allocation2], %s1411
          %1413 = dma.done %s1409, 2048
        $region56: #{stem_conv_bn_relu.1} parent=51 // pred_fallthru
          _
        // Predicated region
        $region57: #{stem_conv_bn_relu.1} parent=51 // pred_check
          %p1414 = pneg %p163
        $region58: #{stem_conv_bn_relu.1} parent=51 // pred_check_branch
          %1416 = sbr.rel (%p1414) target = $region60
        $region59: #{stem_conv_bn_relu.1} parent=51 // pred_region
          %s1417 = sand.u32 %s25, 1
          %s1418 = scalar_lea.sflag [#allocation5], %s1417
          %s1419 = sand.u32 %s148, 1
          %s1420 = smul.addr %s1419, 128
          %s1421 = scalar_lea.vmem [#allocation4], %s1420
          %1422 = dma.done %s1418, 2048
        $region60: #{stem_conv_bn_relu.1} parent=51 // pred_fallthru
          _
        // Predicated region
        $region61: #{stem_conv_bn_relu.1} parent=51 // pred_check
          %p1423 = pneg %p189
        $region62: #{stem_conv_bn_relu.1} parent=51 // pred_check_branch
          %1425 = sbr.rel (%p1423) target = $region64
        $region63: #{stem_conv_bn_relu.1} parent=51 // pred_region
          %s1426 = sand.u32 %s25, 1
          %s1427 = scalar_lea.sflag [#allocation5], %s1426
          %s1428 = sand.u32 %s174, 1
          %s1429 = smul.addr %s1428, 128
          %s1430 = scalar_lea.vmem [#allocation6], %s1429
          %1431 = dma.done %s1427, 2048
        $region64: #{stem_conv_bn_relu.1} parent=51 // pred_fallthru
          _
      $region52: #{stem_conv_bn_relu.1} parent=5 // pred_fallthru
        _
    $region6: #{stem_conv_bn_relu.1} parent=1 // loop_footer
      %s23 = sadd.s32 1, %s19
    $region7: #{stem_conv_bn_relu.1} parent=1 // loop_footer_branch
      %18 = sbr.rel target = $region3
    $region8: #{stem_conv_bn_relu.1} parent=1 // loop_exit
      _
    %1432 = vsyncpa [#allocation3], 1
    %s1433 = scalar_lea.sflag [#allocation3], 1
    %1434 = vsyncpa %s1433, 1
    %1435 = vsyncpa [#allocation5], 1
    %s1436 = scalar_lea.sflag [#allocation5], 1
    %1437 = vsyncpa %s1436, 1

</llo_original>
